<compile_context>
chip_gen: v7x
topology: tpu7x:2x2x1
jax: 0.10.0
libtpu: 0.0.40
codegen_flags: <defaults>
</compile_context>

<pallas_src>
import functools

import jax
import jax.numpy as jnp
from jax.experimental import pallas as pl
from jax.experimental.pallas import tpu as pltpu

_LANES = 128
_LOG_CLAMP = -100.0          # torch BCELoss clamps log() at -100
_MAX_TILE_ROWS_CAP = 8192    # 8 MiB/input f32 blocks double-buffered = 32 MiB


def _cdiv(a, b):
    return -(-a // b)


def _round_up(a, b):
    return _cdiv(a, b) * b


def _sublane_multiple(dtype):
    # f32 -> 8, bf16 -> 16, int8/fp8 -> 32 (sub-32-bit packs along sublanes).
    return max(8, 32 // max(1, jnp.dtype(dtype).itemsize))


def _bce_partial_kernel(p_ref, t_ref, out_ref, *, tile_rows, valid_rows,
                        blocks_per_part, hard_labels):
    c = pl.program_id(0)          # partition ("core") axis -- parallel
    i = pl.program_id(1)          # row-block axis          -- reduction

    @pl.when(i == 0)
    def _():
        out_ref[...] = jnp.zeros_like(out_ref)

    # Cast inside the kernel (inputs may arrive as bf16); math stays in f32.
    p = p_ref[...].astype(jnp.float32)
    t = t_ref[...].astype(jnp.float32)

    # Mask rows beyond the true data (partial last block / phantom blocks of
    # an odd partition split).  Applied BEFORE the logs: (p=0, t=0) gives an
    # exactly-zero BCE contribution and no NaNs from stale VMEM contents.
    row0 = (c * blocks_per_part + i) * tile_rows
    row_ids = row0 + jax.lax.broadcasted_iota(jnp.int32, (tile_rows, _LANES), 0)
    valid = row_ids < valid_rows
    p = jnp.where(valid, p, 0.0)
    t = jnp.where(valid, t, 0.0)

    if hard_labels:
        # One EUP log per element; only valid for hard 0/1 targets.
        q = jnp.where(t >= 0.5, p, 1.0 - p)
        bce = -jnp.maximum(jnp.log(q), _LOG_CLAMP)
    else:
        log_p = jnp.maximum(jnp.log(p), _LOG_CLAMP)
        log_1mp = jnp.maximum(jnp.log(1.0 - p), _LOG_CLAMP)
        bce = -(t * log_p + (1.0 - t) * log_1mp)

    # Pure-VPU accumulation into the (8,128) VMEM-resident output block; the
    # full cross-lane/sublane reduce happens once, outside the kernel.
    out_ref[...] += bce.reshape(tile_rows // 8, 8, _LANES).sum(axis=0)


def _bce_mean(p, t, *, max_tile_rows=2048, hard_labels=False):
    """mean(BCE(p, t)) with torch's -100 log clamp, batch-tiled on TPU."""
    assert p.size == t.size, (p.shape, t.shape)
    n = int(p.size)
    if n == 0:  # torch BCELoss mean over an empty tensor is NaN
        return jnp.array(jnp.nan, jnp.float32)

    sub = max(_sublane_multiple(p.dtype), _sublane_multiple(t.dtype))
    rows = _cdiv(n, _LANES)                    # true data rows
    rows_p = _round_up(rows, sub)              # sublane-aligned array rows
    tile_rows = min(
        _round_up(min(int(max_tile_rows), _MAX_TILE_ROWS_CAP), sub), rows_p)
    num_blocks = _cdiv(rows_p, tile_rows)
    num_partitions = 2 if num_blocks >= 2 else 1
    blocks_per_part = _cdiv(num_blocks, num_partitions)
    last_block = num_blocks - 1

    # Lane-dense repack.  Pad (p=0, t=0 => zero contribution) only to
    # sublane-row granularity; sub-tile remainder is masked in-kernel.
    pad = rows_p * _LANES - n
    pf = jnp.ravel(p)
    tf = jnp.ravel(t)
    if pad:
        pf = jnp.pad(pf, (0, pad))
        tf = jnp.pad(tf, (0, pad))
    p2 = pf.reshape(rows_p, _LANES)
    t2 = tf.reshape(rows_p, _LANES)

    def in_index(c, i):
        # Clamp phantom blocks (odd split across partitions) onto the last
        # valid block; they are fully masked in-kernel -> zero contribution.
        return (jnp.minimum(c * blocks_per_part + i, last_block), 0)

    kernel = functools.partial(
        _bce_partial_kernel, tile_rows=tile_rows, valid_rows=rows,
        blocks_per_part=blocks_per_part, hard_labels=hard_labels)

    itemsizes = jnp.dtype(p.dtype).itemsize + jnp.dtype(t.dtype).itemsize
    out_rows = num_partitions * 8
    vmem_need = (2 * tile_rows * _LANES * itemsizes          # double-buffered inputs
                 + 4 * out_rows * _LANES * 4 + (2 << 20))    # output + slack
    vmem_limit = int(min(max(vmem_need, 32 << 20), 48 << 20))

    cost = pl.CostEstimate(
        flops=6 * n,
        transcendentals=(1 if hard_labels else 2) * n,
        bytes_accessed=n * itemsizes + out_rows * _LANES * 4)

    partials = pl.pallas_call(
        kernel,
        out_shape=jax.ShapeDtypeStruct((out_rows, _LANES), jnp.float32),
        grid=(num_partitions, blocks_per_part),
        in_specs=[
            pl.BlockSpec((tile_rows, _LANES), in_index),
            pl.BlockSpec((tile_rows, _LANES), in_index),
        ],
        out_specs=pl.BlockSpec((8, _LANES), lambda c, i: (c, 0)),
        compiler_params=pltpu.CompilerParams(
            dimension_semantics=("parallel", "arbitrary"),
            vmem_limit_bytes=vmem_limit),
        cost_estimate=cost,
    )(p2, t2)

    # Tiny finalize (<= 2048 f32): cross-lane reduce + 1/n scale.
    return jnp.sum(partials) * (1.0 / n)


def vfae_loss(y_pred, y_true, *, max_tile_rows=2048, hard_labels=False):
    """Matches VFAELoss.forward: returns only the supervised BCE loss.

    x, s, x_decoded and z1_enc_{mu,logvar} only feed values the torch forward
    never returns (x_s, reconstruction_loss, kl_loss_z1, loss), so they are
    intentionally never touched here (dead work inside a custom call cannot be
    DCE'd by XLA).
    """
    return _bce_mean(y_pred["y_decoded"], y_true["y"],
                     max_tile_rows=max_tile_rows, hard_labels=hard_labels)


def _reference(y_pred, y_true):
    p = y_pred["y_decoded"].astype(jnp.float32)
    t = y_true["y"].astype(jnp.float32)
    return jnp.mean(-(t * jnp.maximum(jnp.log(p), -100.0)
                      + (1.0 - t) * jnp.maximum(jnp.log(1.0 - p), -100.0)))


if __name__ == "__main__":
    key = jax.random.PRNGKey(0)
    keys = jax.random.split(key, 12)

    # --- small shapes consistent with the module ---
    B, Dx, Dz = 8, 32, 16
    x = jax.random.bernoulli(keys[0], 0.5, (B, Dx)).astype(jnp.float32)
    s = jax.random.bernoulli(keys[1], 0.3, (B, 1)).astype(jnp.float32)
    y = jax.random.bernoulli(keys[2], 0.5, (B, 1)).astype(jnp.float32)
    y_pred = {
        "y_decoded": jax.nn.sigmoid(jax.random.normal(keys[3], (B, 1), jnp.float32)),
        "x_decoded": jax.nn.sigmoid(jax.random.normal(keys[4], (B, Dx), jnp.float32)),
        "z1_enc_mu": jax.random.normal(keys[5], (B, Dz), jnp.float32),
        "z1_enc_logvar": 0.1 * jax.random.normal(keys[6], (B, Dz), jnp.float32),
    }
    y_true = {"x": x, "s": s, "y": y}

    out = jax.block_until_ready(vfae_loss(y_pred, y_true))
    ref = _reference(y_pred, y_true)
    assert jnp.allclose(out, ref, rtol=1e-5, atol=1e-6), (out, ref)

    # --- larger batch, small tile: exercises multi-block + 2-partition path ---
    B2 = 2048
    y2 = jax.random.bernoulli(keys[7], 0.5, (B2, 1)).astype(jnp.float32)
    yd2 = jax.nn.sigmoid(jax.random.normal(keys[8], (B2, 1), jnp.float32))
    yp2 = dict(y_pred, y_decoded=yd2)
    yt2 = dict(y_true, y=y2)
    out2 = jax.block_until_ready(vfae_loss(yp2, yt2, max_tile_rows=8))
    ref2 = _reference(yp2, yt2)
    assert jnp.allclose(out2, ref2, rtol=1e-5, atol=1e-5), (out2, ref2)

    # --- non-multiple-of-128 batch, bf16 predictions: exercises the in-kernel
    #     remainder mask, the bf16 sublane rounding and the single-log path ---
    B3 = 1000
    y3 = jax.random.bernoulli(keys[9], 0.5, (B3, 1)).astype(jnp.float32)
    yd3 = jax.nn.sigmoid(jax.random.normal(keys[10], (B3, 1), jnp.float32)
                         ).astype(jnp.bfloat16)
    yp3 = dict(y_pred, y_decoded=yd3)
    yt3 = dict(y_true, y=y3)
    ref3 = _reference(yp3, yt3)
    out3a = jax.block_until_ready(vfae_loss(yp3, yt3))
    out3b = jax.block_until_ready(vfae_loss(yp3, yt3, hard_labels=True))
    assert jnp.allclose(out3a, ref3, rtol=1e-5, atol=1e-5), (out3a, ref3)
    assert jnp.allclose(out3b, ref3, rtol=1e-5, atol=1e-5), (out3b, ref3)

    print("KERNEL_OK")
</pallas_src>

<mosaic_0001>
module attributes {stable_mosaic.version = 11 : i64} {
  func.func @_bce_partial_kernel(%arg0: i32, %arg1: i32, %arg2: memref<8x128xf32, #tpu.memory_space<vmem>>, %arg3: memref<8x128xf32, #tpu.memory_space<vmem>>, %arg4: memref<8x128xf32, #tpu.memory_space<vmem>>) attributes {dimension_semantics = [#tpu.dimension_semantics<parallel>, #tpu.dimension_semantics<arbitrary>], iteration_bounds = array<i64: 1, 1>, scalar_prefetch = 0 : i64, scratch_operands = 0 : i64, tpu.core_type = #tpu.core_type<tc>, window_params = [{transform_indices = @transform_0, window_bounds = array<i64: 8, 128>}, {transform_indices = @transform_1, window_bounds = array<i64: 8, 128>}, {transform_indices = @transform_2, window_bounds = array<i64: 8, 128>}]} {
    %c0_i32 = arith.constant 0 : i32
    %0 = arith.cmpi eq, %arg1, %c0_i32 : i32
    %1 = arith.extui %0 : i1 to i32
    %c0_i32_0 = arith.constant 0 : i32
    %2 = arith.cmpi ne, %1, %c0_i32_0 : i32
    scf.if %2 {
      %cst_16 = arith.constant 0.000000e+00 : f32
      %37 = vector.broadcast %cst_16 : f32 to vector<8x128xf32>
      %c0_17 = arith.constant 0 : index
      %c0_18 = arith.constant 0 : index
      %38 = vector.load %arg4[%c0_17, %c0_18] : memref<8x128xf32, #tpu.memory_space<vmem>>, vector<8x128xf32>
      tpu.vector_store %arg4[%c0_17, %c0_18], %37 {strides = array<i32>} : memref<8x128xf32, #tpu.memory_space<vmem>>, vector<8x128xf32>,
    } else {
    }
    %c0 = arith.constant 0 : index
    %c0_1 = arith.constant 0 : index
    %3 = vector.load %arg2[%c0, %c0_1] : memref<8x128xf32, #tpu.memory_space<vmem>>, vector<8x128xf32>
    %c0_2 = arith.constant 0 : index
    %c0_3 = arith.constant 0 : index
    %4 = vector.load %arg3[%c0_2, %c0_3] : memref<8x128xf32, #tpu.memory_space<vmem>>, vector<8x128xf32>
    %c1_i32 = arith.constant 1 : i32
    %5 = arith.muli %arg0, %c1_i32 : i32
    %6 = arith.addi %5, %arg1 : i32
    %c8_i32 = arith.constant 8 : i32
    %7 = arith.muli %6, %c8_i32 : i32
    %8 = tpu.iota {dimensions = array<i32: 0>} : vector<8x128xi32>
    %9 = vector.broadcast %7 : i32 to vector<8x128xi32>
    %10 = arith.addi %9, %8 : vector<8x128xi32>
    %c1_i32_4 = arith.constant 1 : i32
    %11 = vector.broadcast %c1_i32_4 : i32 to vector<8x128xi32>
    %12 = arith.cmpi slt, %10, %11 : vector<8x128xi32>
    %cst = arith.constant 0.000000e+00 : f32
    %13 = vector.broadcast %cst : f32 to vector<8x128xf32>
    %14 = arith.select %12, %3, %13 : vector<8x128xi1>, vector<8x128xf32>
    %cst_5 = arith.constant 0.000000e+00 : f32
    %15 = vector.broadcast %cst_5 : f32 to vector<8x128xf32>
    %16 = arith.select %12, %4, %15 : vector<8x128xi1>, vector<8x128xf32>
    %17 = math.log %14 : vector<8x128xf32>
    %cst_6 = arith.constant -1.000000e+02 : f32
    %18 = vector.broadcast %cst_6 : f32 to vector<8x128xf32>
    %19 = arith.maximumf %17, %18 : vector<8x128xf32>
    %cst_7 = arith.constant 1.000000e+00 : f32
    %20 = vector.broadcast %cst_7 : f32 to vector<8x128xf32>
    %21 = arith.subf %20, %14 : vector<8x128xf32>
    %22 = math.log %21 : vector<8x128xf32>
    %cst_8 = arith.constant -1.000000e+02 : f32
    %23 = vector.broadcast %cst_8 : f32 to vector<8x128xf32>
    %24 = arith.maximumf %22, %23 : vector<8x128xf32>
    %25 = arith.mulf %16, %19 : vector<8x128xf32>
    %cst_9 = arith.constant 1.000000e+00 : f32
    %26 = vector.broadcast %cst_9 : f32 to vector<8x128xf32>
    %27 = arith.subf %26, %16 : vector<8x128xf32>
    %28 = arith.mulf %27, %24 : vector<8x128xf32>
    %29 = arith.addf %25, %28 : vector<8x128xf32>
    %cst_10 = arith.constant 0.000000e+00 : f32
    %30 = vector.broadcast %cst_10 : f32 to vector<8x128xf32>
    %31 = arith.subf %30, %29 : vector<8x128xf32>
    %c0_11 = arith.constant 0 : index
    %c0_12 = arith.constant 0 : index
    %32 = vector.load %arg4[%c0_11, %c0_12] : memref<8x128xf32, #tpu.memory_space<vmem>>, vector<8x128xf32>
    %33 = vector.shape_cast %31 : vector<8x128xf32> to vector<1x8x128xf32>
    %cst_13 = arith.constant dense<0.000000e+00> : vector<8x128xf32>
    %34 = vector.multi_reduction <add>, %33, %cst_13 [0] : vector<1x8x128xf32> to vector<8x128xf32>
    %35 = arith.addf %32, %34 : vector<8x128xf32>
    %c0_14 = arith.constant 0 : index
    %c0_15 = arith.constant 0 : index
    %36 = vector.load %arg4[%c0_14, %c0_15] : memref<8x128xf32, #tpu.memory_space<vmem>>, vector<8x128xf32>
    tpu.vector_store %arg4[%c0_14, %c0_15], %35 {strides = array<i32>} : memref<8x128xf32, #tpu.memory_space<vmem>>, vector<8x128xf32>,
    return
  }
  func.func @transform_0(%arg0: i32, %arg1: i32) -> (i32, i32) {
    %c1_i32 = arith.constant 1 : i32
    %0 = arith.muli %arg0, %c1_i32 : i32
    %1 = arith.addi %0, %arg1 : i32
    %c0_i32 = arith.constant 0 : i32
    %2 = arith.minsi %1, %c0_i32 : i32
    %c0_i32_0 = arith.constant 0 : i32
    %c0_i32_1 = arith.constant 0 : i32
    return %2, %c0_i32_0 : i32, i32
  }
  func.func @transform_1(%arg0: i32, %arg1: i32) -> (i32, i32) {
    %c1_i32 = arith.constant 1 : i32
    %0 = arith.muli %arg0, %c1_i32 : i32
    %1 = arith.addi %0, %arg1 : i32
    %c0_i32 = arith.constant 0 : i32
    %2 = arith.minsi %1, %c0_i32 : i32
    %c0_i32_0 = arith.constant 0 : i32
    %c0_i32_1 = arith.constant 0 : i32
    return %2, %c0_i32_0 : i32, i32
  }
  func.func @transform_2(%arg0: i32, %arg1: i32) -> (i32, i32) {
    %c0_i32 = arith.constant 0 : i32
    %c0_i32_0 = arith.constant 0 : i32
    return %arg0, %c0_i32 : i32, i32
  }
}

</mosaic_0001>

<llo_original>
// kernel: tpu_custom_call.1
$region0: #{tpu_custom_call.1}
  #allocation0 [shape = 'u32[]', space=smem, size = 0x4, offset = 0x4, fixed_abs, tag = 'smem constant byte address 0x4 - core index']
  #allocation1 [shape = 'u32[144,128]{1,0:T(1,128)}', space=vmem, size = 0x12000, scoped, tag = 'internal scratch']
  %s0 = inlined_call_operand.hbm [shape: f32[8,128], index: 0, kind: input, shape index: {}]
  %s1 = inlined_call_operand.hbm [shape: f32[8,128], index: 1, kind: input, shape index: {}]
  %s2 = inlined_call_operand.hbm [shape: f32[8,128], index: 2, kind: output, shape index: {}]
  %s3 = sld [smem:[#allocation0]]
  $region30: #{tpu_custom_call.1} parent=0
    _
  %s5 = ssub.s32 1, %s3
  %s6 = scalar_select 0, %s5, %s3
  $region1: #{tpu_custom_call.1} parent=0
    #allocation2 [shape = 'u8[4096]{0}', space=vmem, size = 0x1000, scoped, tag = 'input window, operand 0, single buffered']
    #allocation3 [shape = 's32[1]{0}', space=sflag, size = 0x4, scoped, tag = 'scoped memory for tpu_custom_call.1']
    #allocation4 [shape = 's32[1]{0}', space=sflag, size = 0x4, scoped, tag = 'scoped memory for tpu_custom_call.1']
    #allocation5 [shape = 'u8[4096]{0}', space=vmem, size = 0x1000, scoped, tag = 'input window, operand 1, single buffered']
    #allocation6 [shape = 's32[1]{0}', space=sflag, size = 0x4, scoped, tag = 'scoped memory for tpu_custom_call.1']
    #allocation7 [shape = 'u8[4096]{0}', space=vmem, size = 0x1000, scoped, tag = 'output window, operand 0, single buffered']
    %7 = vsyncpa [#allocation3], 0
    %8 = vsyncpa [#allocation6], 0
    %9 = vsyncpa [#allocation4], 0
    // Predicated region
    $region2: #{tpu_custom_call.1} parent=1 // pred_check
      _
    $region3: #{tpu_custom_call.1} parent=1 // pred_check_branch
      %11 = sbr.rel (0) target = $region5
    $region4: #{tpu_custom_call.1} parent=1 // pred_region
      %s12 = sadd.s32 0, 0
      %p13 = scmp.lt.s32.totalorder %s12, 0
      %s14 = scalar_select %p13, %s12, 0
      %s16 = ssub.s32 128, 128
      %17 = vsyncadd [#allocation3], %s16
      %s18 = smul.addr %s14, 128
      %s19 = scalar_lea.hbm %s0, %s18
      %s21 = sshll.u32 [#allocation2], 4
      %s22 = int_to_ptr.vmem [resolvable:$true] %s21
      %24 = dma.hbm_to_vmem [thread:$0]  %s19, 128, %s22, [#allocation3]
    $region5: #{tpu_custom_call.1} parent=1 // pred_fallthru
      _
    // Predicated region
    $region6: #{tpu_custom_call.1} parent=1 // pred_check
      _
    $region7: #{tpu_custom_call.1} parent=1 // pred_check_branch
      %26 = sbr.rel (0) target = $region9
    $region8: #{tpu_custom_call.1} parent=1 // pred_region
      %s27 = sadd.s32 0, 0
      %p28 = scmp.lt.s32.totalorder %s27, 0
      %s29 = scalar_select %p28, %s27, 0
      %s31 = ssub.s32 128, 128
      %32 = vsyncadd [#allocation6], %s31
      %s33 = smul.addr %s29, 128
      %s34 = scalar_lea.hbm %s1, %s33
      %s36 = sshll.u32 [#allocation5], 4
      %s37 = int_to_ptr.vmem [resolvable:$true] %s36
      %39 = dma.hbm_to_vmem [thread:$0]  %s34, 128, %s37, [#allocation6]
    $region9: #{tpu_custom_call.1} parent=1 // pred_fallthru
      _
    // Predicated region
    $region10: #{tpu_custom_call.1} parent=1 // pred_check
      _
    $region11: #{tpu_custom_call.1} parent=1 // pred_check_branch
      %41 = sbr.rel (0) target = $region13
    $region12: #{tpu_custom_call.1} parent=1 // pred_region
      %42 = dma.done [#allocation3], 128
    $region13: #{tpu_custom_call.1} parent=1 // pred_fallthru
      _
    // Predicated region
    $region14: #{tpu_custom_call.1} parent=1 // pred_check
      _
    $region15: #{tpu_custom_call.1} parent=1 // pred_check_branch
      %44 = sbr.rel (0) target = $region17
    $region16: #{tpu_custom_call.1} parent=1 // pred_region
      %45 = dma.done [#allocation6], 128
    $region17: #{tpu_custom_call.1} parent=1 // pred_fallthru
      _
    %s46 = sadd.s32 0, 0
    %p47 = scmp.lt.s32.totalorder %s46, 0
    %s48 = scalar_select %p47, %s46, 0
    %s49 = sadd.s32 0, 0
    %p50 = scmp.lt.s32.totalorder %s49, 0
    %s51 = scalar_select %p50, %s49, 0
    %p52 = scmp.eq.s32.totalorder 0, 0
    // Predicated region
    $region18: #{tpu_custom_call.1} parent=1 // pred_check
      %p53 = pneg %p52
    $region19: #{tpu_custom_call.1} parent=1 // pred_check_branch
      %55 = sbr.rel (%p53) target = $region21
    $region20: #{tpu_custom_call.1} parent=1 // pred_region
      %56 = vst [vmem:[#allocation7] sm:$0xff] 0.0
    $region21: #{tpu_custom_call.1} parent=1 // pred_fallthru
      _
    %v57 = vld [vmem:[#allocation2] sm:$0xff]
    %v58 = vld [vmem:[#allocation5] sm:$0xff]
    %s59 = sadd.s32 0, 0
    %s60 = smul.u32 %s59, 8
    %v61 = vlaneseq
    %v62 = vshrl.u32 %v61, 7
    %v63 = vstv %s60
    %v64 = vadd.s32 %v63, %v62
    %vm65 = vcmp.lt.s32.totalorder %v64, 1
    %v66 = vsel %vm65, %v57, 0.0
    %v67 = vsel %vm65, %v58, 0.0
    %v68 = vlog2.pop %v66
    %v69 = vmul.f32 %v68, 0.6931472
    %v70 = vmax.f32 %v69, -100.0
    %v71 = vsub.f32 1.0, %v66
    %v72 = vlog2.pop %v71
    %v73 = vmul.f32 %v72, 0.6931472
    %v74 = vmax.f32 %v73, -100.0
    %v75 = vmul.f32 %v67, %v70
    %v76 = vsub.f32 1.0, %v67
    %v77 = vmul.f32 %v76, %v74
    %v78 = vadd.f32 %v75, %v77
    %v79 = vsub.f32 0.0, %v78
    %v80 = vld [vmem:[#allocation7] sm:$0xff]
    %v81 = vadd.f32 %v79, 0.0
    %v82 = vadd.f32 %v80, %v81
    %83 = vst [vmem:[#allocation7] sm:$0xff] %v82
    // Predicated region
    $region22: #{tpu_custom_call.1} parent=1 // pred_check
      _
    $region23: #{tpu_custom_call.1} parent=1 // pred_check_branch
      %85 = sbr.rel (0) target = $region25
    $region24: #{tpu_custom_call.1} parent=1 // pred_region
      %s87 = ssub.s32 128, 128
      %88 = vsyncadd [#allocation4], %s87
      %s90 = sshll.u32 [#allocation7], 4
      %s91 = int_to_ptr.vmem [resolvable:$true] %s90
      %93 = dma.vmem_to_hbm [thread:$0]  %s91, 128, %s2, [#allocation4]
    $region25: #{tpu_custom_call.1} parent=1 // pred_fallthru
      _
    // Predicated region
    $region26: #{tpu_custom_call.1} parent=1 // pred_check
      _
    $region27: #{tpu_custom_call.1} parent=1 // pred_check_branch
      %95 = sbr.rel (0) target = $region29
    $region28: #{tpu_custom_call.1} parent=1 // pred_region
      %96 = dma.done [#allocation4], 128
    $region29: #{tpu_custom_call.1} parent=1 // pred_fallthru
      _
    %97 = vsyncpa [#allocation3], 1
    %98 = vsyncpa [#allocation6], 1
    %99 = vsyncpa [#allocation4], 1

</llo_original>
